<compile_context>
chip_gen: v6e
topology: v6e:2x2x1
jax: 0.10.0
libtpu: 0.0.40
codegen_flags: <defaults>
</compile_context>

<pallas_src>
import functools
import math

import jax
import jax.numpy as jnp
from jax.experimental import pallas as pl
from jax.experimental.pallas import tpu as pltpu


def _round_up(x, m):
    return ((x + m - 1) // m) * m


def _cdiv(a, b):
    return (a + b - 1) // b


# ----------------------------------------------------------------------------
# Fused kernel: (encoder+RFF projection) -> cos/sin -> grouped Linear+ReLU
#               -> block-diagonal per-factor heads
# ----------------------------------------------------------------------------
def rff_probe_kernel(x_ref, wxr_ref, w1c_ref, w1s_ref, b1_ref, wp_ref, bp_ref,
                     out_ref):
    # vp = 2*pi * encode(x) @ B_rff.T ; w_xr already folds encoder + 2*pi*B_rff.T.
    # x / w_xr may be bf16 -> bf16 MXU matmul with f32 accumulation.
    vp = jnp.dot(x_ref[...], wxr_ref[...], preferred_element_type=jnp.float32)
    c = jnp.cos(vp)
    s = jnp.sin(vp)
    # rff = [cos | sin];  rff @ W1 == cos @ W1[:E] + sin @ W1[E:]
    # (avoids a lane-dim concatenate inside the kernel).
    h = jnp.dot(c, w1c_ref[...], preferred_element_type=jnp.float32)
    h = h + jnp.dot(s, w1s_ref[...], preferred_element_type=jnp.float32)
    h = jnp.maximum(h + b1_ref[...], 0.0)                # grouped Linear + ReLU
    # Block-diagonal per-factor heads -> lane-dense padded output slab.
    o = jnp.dot(h, wp_ref[...], preferred_element_type=jnp.float32) + bp_ref[...]
    out_ref[...] = o.astype(out_ref.dtype)


# ----------------------------------------------------------------------------
# One-time weight packing (hoisted out of the per-call hot path)
# ----------------------------------------------------------------------------
def pack_rff_probe_params(params, factor_sizes, factor_discrete, *,
                          encoder_in_dtype=jnp.bfloat16):
    """Pack module weights into MXU-friendly operands.  Call ONCE and reuse."""
    b_rff = jnp.asarray(params["b_rff"], jnp.float32)             # [E, L]
    E, _ = b_rff.shape
    w_rff = (2.0 * math.pi) * b_rff.T                              # [L, E]

    w_enc = params.get("w_enc", None)
    if w_enc is not None:
        # TODO(synk): model.encode is an external frozen encoder; a fixed LINEAR
        # projection stands in for it here, so it can be folded into the RFF
        # projection (single [Cin, E] matmul).  If the real encoder is
        # nonlinear, drop "w_enc" from params and feed its features as `x`.
        w_xr = jnp.dot(jnp.asarray(w_enc, jnp.float32), w_rff,
                       precision=jax.lax.Precision.HIGHEST)        # [Cin, E]
    else:
        w_xr = w_rff                                               # features fed directly

    H = params["w1"][0].shape[1]                  # hidden_dim per factor (== 2*E)
    F = len(params["w1"])
    FH = F * H
    w1_all = jnp.concatenate([jnp.asarray(w, jnp.float32) for w in params["w1"]],
                             axis=1)                               # [2E, F*H]
    b1_all = jnp.concatenate([jnp.asarray(b, jnp.float32) for b in params["b1"]],
                             axis=0).reshape(1, FH)
    w1_cos, w1_sin = w1_all[:E, :], w1_all[E:, :]                  # rff = [cos | sin]

    num_outputs = sum(fs if fd else 1
                      for fs, fd in zip(factor_sizes, factor_discrete))
    O_pad = _round_up(max(num_outputs, 1), 128)                    # lane-dense output
    wp = jnp.zeros((FH, O_pad), jnp.float32)                       # block-diag heads
    bp = jnp.zeros((1, O_pad), jnp.float32)
    off = 0
    for i in range(F):
        sz = params["wp"][i].shape[1]
        wp = wp.at[i * H:(i + 1) * H, off:off + sz].set(
            jnp.asarray(params["wp"][i], jnp.float32))
        bp = bp.at[0, off:off + sz].set(jnp.asarray(params["bp"][i], jnp.float32))
        off += sz

    return dict(
        w_xr=w_xr.astype(encoder_in_dtype),   # dominant-operand dtype (bf16 default)
        w1c=w1_cos, w1s=w1_sin, b1=b1_all, wp=wp, bp=bp,
        num_outputs=int(num_outputs), o_pad=int(O_pad),
        enc_dim=int(E), fh=int(FH),
    )


# ----------------------------------------------------------------------------
# Forward wrapper: batch tiling + pallas_call
# ----------------------------------------------------------------------------
def rff_probe_forward(x_nchw, packed, *, batch_tile=1024,
                      grid_free_max_batch=128,
                      vmem_budget_bytes=30 * 1024 * 1024):
    w_xr, w1c, w1s = packed["w_xr"], packed["w1c"], packed["w1s"]
    b1, wp, bp = packed["b1"], packed["wp"], packed["bp"]
    num_outputs, O_pad = packed["num_outputs"], packed["o_pad"]
    E, FH = packed["enc_dim"], packed["fh"]

    B = x_nchw.shape[0]
    in_dtype = w_xr.dtype
    # bf16 input halves HBM traffic on the dominant operand; ideally x already
    # arrives in bf16 (or the cast fuses into its producer under jit).
    x_flat = x_nchw.reshape(B, -1).astype(in_dtype)
    Cin = x_flat.shape[1]
    x_bytes = jnp.dtype(in_dtype).itemsize
    row_align = 8 if x_bytes >= 4 else (16 if x_bytes == 2 else 32)

    weight_bytes = (w_xr.size * x_bytes + (w1c.size + w1s.size + b1.size) * 4
                    + (wp.size + bp.size) * 4)
    row_bytes = Cin * x_bytes + O_pad * 4          # x row + out row

    # Largest batch tile whose double-buffered x/out tiles (+ weights) fit the
    # scoped-VMEM budget.
    bt_cap = max(vmem_budget_bytes - 2 * weight_bytes, 0) // (2 * row_bytes)
    bt_cap = max(row_align, (bt_cap // row_align) * row_align)
    # TODO(synk): if Cin grows so large that even a few rows exceed the budget,
    # add a Cin (K) grid axis with an f32 accumulator; not needed at these sizes.

    gridfree_bytes = _round_up(max(B, 1), row_align) * row_bytes + weight_bytes
    use_grid_free = (B <= grid_free_max_batch) and \
                    (gridfree_bytes <= vmem_budget_bytes)

    if use_grid_free:
        BT = _round_up(B, row_align)
        nb = 1
    else:
        # Balanced tiles: avoid up-to-a-full-tile padding waste, and force
        # nb >= 2 so the "parallel" batch axis feeds both v7x TensorCores.
        eff_tile = min(batch_tile, bt_cap)
        nb = max(2, _cdiv(B, eff_tile))
        BT = min(_round_up(_cdiv(B, nb), row_align), bt_cap)
        nb = _cdiv(B, BT)
    B_pad = nb * BT
    if B_pad != B:
        # Padded rows produce garbage (cos(0)=1 path) and are sliced off below;
        # never consume out_pad directly.
        x_flat = jnp.pad(x_flat, ((0, B_pad - B), (0, 0)))

    flops = 2 * B_pad * (Cin * E + 2 * E * FH + FH * O_pad)
    cost = pl.CostEstimate(
        flops=int(flops),
        transcendentals=int(2 * B_pad * E),
        bytes_accessed=int(x_flat.size * x_bytes + B_pad * O_pad * 4
                           + weight_bytes),
    )

    args = (x_flat, w_xr, w1c, w1s, b1, wp, bp)
    out_shape = jax.ShapeDtypeStruct((B_pad, O_pad), jnp.float32)

    if nb == 1:
        # Single tile: no grid, no pipeline machinery; everything resident in
        # VMEM.  Explicit vmem limit sized from the footprint (v5e default is
        # only 16 MiB scoped).
        vmem_spec = pl.BlockSpec(memory_space=pltpu.MemorySpace.VMEM)
        vmem_limit = int(min(max(2 * gridfree_bytes + (1 << 20), 8 << 20),
                             56 << 20))
        out_pad = pl.pallas_call(
            rff_probe_kernel,
            out_shape=out_shape,
            in_specs=[vmem_spec] * len(args),
            out_specs=vmem_spec,
            compiler_params=pltpu.CompilerParams(vmem_limit_bytes=vmem_limit),
            cost_estimate=cost,
        )(*args)
    else:
        # Streaming pass over the batch; weights stay resident (constant
        # index_map).  Batch axis is "parallel" -> shards across v7x's 2 TCs.
        grid_bytes = 2 * BT * row_bytes + 2 * weight_bytes
        vmem_limit = int(min(max(grid_bytes + (4 << 20), 16 << 20), 56 << 20))
        out_pad = pl.pallas_call(
            rff_probe_kernel,
            out_shape=out_shape,
            grid_spec=pltpu.PrefetchScalarGridSpec(
                num_scalar_prefetch=0,
                grid=(nb,),
                in_specs=[
                    pl.BlockSpec((BT, Cin), lambda i: (i, 0)),
                    pl.BlockSpec((Cin, E), lambda i: (0, 0)),
                    pl.BlockSpec((E, FH), lambda i: (0, 0)),
                    pl.BlockSpec((E, FH), lambda i: (0, 0)),
                    pl.BlockSpec((1, FH), lambda i: (0, 0)),
                    pl.BlockSpec((FH, O_pad), lambda i: (0, 0)),
                    pl.BlockSpec((1, O_pad), lambda i: (0, 0)),
                ],
                out_specs=pl.BlockSpec((BT, O_pad), lambda i: (i, 0)),
            ),
            compiler_params=pltpu.CompilerParams(
                dimension_semantics=("parallel",),
                vmem_limit_bytes=vmem_limit,
            ),
            cost_estimate=cost,
        )(*args)

    return out_pad[:B, :num_outputs]


# ----------------------------------------------------------------------------
# Pure-JAX reference (mirrors the PyTorch module step by step)
# ----------------------------------------------------------------------------
def reference_forward(x_nchw, params, factor_sizes, factor_discrete):
    B = x_nchw.shape[0]
    hp = functools.partial(jnp.dot, precision=jax.lax.Precision.HIGHEST,
                           preferred_element_type=jnp.float32)
    feats = x_nchw.reshape(B, -1).astype(jnp.float32)
    if "w_enc" in params:
        feats = hp(feats, params["w_enc"])
    vp = 2.0 * math.pi * hp(feats, params["b_rff"].T)
    rff_feats = jnp.concatenate([jnp.cos(vp), jnp.sin(vp)], axis=-1)
    preds = []
    for i in range(len(factor_sizes)):
        h = jnp.maximum(hp(rff_feats, params["w1"][i]) + params["b1"][i], 0.0)
        preds.append(hp(h, params["wp"][i]) + params["bp"][i])
    return jnp.concatenate(preds, axis=-1)


if __name__ == "__main__":
    # Module config:
    #   model.latent_dim = 32 (frozen encoder), hidden_dim = 32,
    #   num_hidden_layers = 1, num_factors = 2,
    #   factor_sizes = [3, 1], factor_discrete = [True, False] -> num_outputs = 4
    #   rff_sigma_scale = 'const', rff_sigma_gain = 0.1 -> sigma = 0.1
    B, C, HH, WW = 2, 4, 16, 16
    latent_dim = 32
    hidden_dim = 32
    enc_size = hidden_dim // 2
    factor_sizes = [3, 1]
    factor_discrete = [True, False]
    sigma = 0.1

    key = jax.random.PRNGKey(0)
    (k_x, k_enc, k_rff, k_w1a, k_b1a, k_w1b, k_b1b,
     k_wpa, k_bpa, k_wpb, k_bpb, k_x2) = jax.random.split(key, 12)

    x = jax.random.normal(k_x, (B, C, HH, WW), dtype=jnp.float32)
    Cin = C * HH * WW

    params = {
        # TODO(synk): model.encode is an external frozen encoder; a fixed linear
        # projection stands in for it here (folded into the kernel's first matmul).
        "w_enc": jax.random.normal(k_enc, (Cin, latent_dim), jnp.float32) * 0.02,
        # rff GaussianEncoding: b ~ N(0, sigma^2), shape [encoded_size, input_dim]
        "b_rff": jax.random.normal(k_rff, (enc_size, latent_dim), jnp.float32) * sigma,
        # IndependentMLPs grouped conv1d == per-factor Linear(hidden, hidden), [in, out]
        "w1": [jax.random.normal(k_w1a, (hidden_dim, hidden_dim), jnp.float32) * 0.1,
               jax.random.normal(k_w1b, (hidden_dim, hidden_dim), jnp.float32) * 0.1],
        "b1": [jax.random.normal(k_b1a, (hidden_dim,), jnp.float32) * 0.1,
               jax.random.normal(k_b1b, (hidden_dim,), jnp.float32) * 0.1],
        # per-factor heads: Linear(hidden, size_i) if discrete else Linear(hidden, 1)
        "wp": [jax.random.normal(k_wpa, (hidden_dim, factor_sizes[0]), jnp.float32) * 0.1,
               jax.random.normal(k_wpb, (hidden_dim, 1), jnp.float32) * 0.1],
        "bp": [jax.random.normal(k_bpa, (factor_sizes[0],), jnp.float32) * 0.1,
               jax.random.normal(k_bpb, (1,), jnp.float32) * 0.1],
    }
    num_outputs = sum(fs if fd else 1
                      for fs, fd in zip(factor_sizes, factor_discrete))

    # --- default (bf16 encoder input) path, tiny batch -> grid-free kernel ----
    packed_bf16 = pack_rff_probe_params(params, factor_sizes, factor_discrete)
    out = jax.block_until_ready(rff_probe_forward(x, packed_bf16))
    ref = reference_forward(x, params, factor_sizes, factor_discrete)
    assert out.shape == (B, num_outputs)
    assert jnp.allclose(out, ref, atol=5e-2, rtol=5e-2), "bf16 path mismatch"

    # --- f32 encoder input path: tight agreement with the f32 reference -------
    packed_f32 = pack_rff_probe_params(params, factor_sizes, factor_discrete,
                                       encoder_in_dtype=jnp.float32)
    out32 = jax.block_until_ready(rff_probe_forward(x, packed_f32))
    assert jnp.allclose(out32, ref, atol=2e-3, rtol=2e-3), "f32 path mismatch"

    # --- larger batch: exercises the streaming grid path with balanced tiles --
    B2 = 300
    x2 = jax.random.normal(k_x2, (B2, C, HH, WW), dtype=jnp.float32)
    out2 = jax.block_until_ready(
        rff_probe_forward(x2, packed_bf16, batch_tile=128,
                          grid_free_max_batch=64))
    ref2 = reference_forward(x2, params, factor_sizes, factor_discrete)
    assert out2.shape == (B2, num_outputs)
    assert jnp.allclose(out2, ref2, atol=5e-2, rtol=5e-2), "grid path mismatch"

    # TODO(synk): forward_factors' per-factor softmax split is post-processing
    # glue outside the kernel hot path.
    print("KERNEL_OK")
</pallas_src>

<mosaic_0001>
module attributes {stable_mosaic.version = 11 : i64} {
  func.func @rff_probe_kernel(%arg0: memref<16x1024xbf16, #tpu.memory_space<vmem>>, %arg1: memref<1024x16xbf16, #tpu.memory_space<vmem>>, %arg2: memref<16x64xf32, #tpu.memory_space<vmem>>, %arg3: memref<16x64xf32, #tpu.memory_space<vmem>>, %arg4: memref<1x64xf32, #tpu.memory_space<vmem>>, %arg5: memref<64x128xf32, #tpu.memory_space<vmem>>, %arg6: memref<1x128xf32, #tpu.memory_space<vmem>>, %arg7: memref<16x128xf32, #tpu.memory_space<vmem>>) attributes {dimension_semantics = [], scalar_prefetch = 0 : i64, scratch_operands = 0 : i64, tpu.core_type = #tpu.core_type<tc>} {
    %c0 = arith.constant 0 : index
    %c0_0 = arith.constant 0 : index
    %0 = vector.load %arg0[%c0, %c0_0] : memref<16x1024xbf16, #tpu.memory_space<vmem>>, vector<16x1024xbf16>
    %c0_1 = arith.constant 0 : index
    %c0_2 = arith.constant 0 : index
    %1 = vector.load %arg1[%c0_1, %c0_2] : memref<1024x16xbf16, #tpu.memory_space<vmem>>, vector<1024x16xbf16>
    %cst = arith.constant dense<0.000000e+00> : vector<16x16xf32>
    %2 = tpu.matmul %0, %1, %cst {dimension_numbers = #tpu.dot_dimension_numbers<[1], [0], [0], [1], [0, 0, 1, 1], [], []>} : vector<16x1024xbf16>, vector<1024x16xbf16>, vector<16x16xf32> -> vector<16x16xf32>
    %3 = math.cos %2 : vector<16x16xf32>
    %4 = math.sin %2 : vector<16x16xf32>
    %c0_3 = arith.constant 0 : index
    %c0_4 = arith.constant 0 : index
    %5 = vector.load %arg2[%c0_3, %c0_4] : memref<16x64xf32, #tpu.memory_space<vmem>>, vector<16x64xf32>
    %cst_5 = arith.constant dense<0.000000e+00> : vector<16x64xf32>
    %6 = tpu.matmul %3, %5, %cst_5 {dimension_numbers = #tpu.dot_dimension_numbers<[1], [0], [0], [1], [0, 0, 1, 1], [], []>} : vector<16x16xf32>, vector<16x64xf32>, vector<16x64xf32> -> vector<16x64xf32>
    %c0_6 = arith.constant 0 : index
    %c0_7 = arith.constant 0 : index
    %7 = vector.load %arg3[%c0_6, %c0_7] : memref<16x64xf32, #tpu.memory_space<vmem>>, vector<16x64xf32>
    %cst_8 = arith.constant dense<0.000000e+00> : vector<16x64xf32>
    %8 = tpu.matmul %4, %7, %cst_8 {dimension_numbers = #tpu.dot_dimension_numbers<[1], [0], [0], [1], [0, 0, 1, 1], [], []>} : vector<16x16xf32>, vector<16x64xf32>, vector<16x64xf32> -> vector<16x64xf32>
    %9 = arith.addf %6, %8 : vector<16x64xf32>
    %c0_9 = arith.constant 0 : index
    %c0_10 = arith.constant 0 : index
    %10 = vector.load %arg4[%c0_9, %c0_10] : memref<1x64xf32, #tpu.memory_space<vmem>>, vector<1x64xf32>
    %11 = vector.broadcast %10 : vector<1x64xf32> to vector<16x64xf32>
    %12 = arith.addf %9, %11 : vector<16x64xf32>
    %cst_11 = arith.constant 0.000000e+00 : f32
    %13 = vector.broadcast %cst_11 : f32 to vector<16x64xf32>
    %14 = arith.maximumf %12, %13 : vector<16x64xf32>
    %c0_12 = arith.constant 0 : index
    %c0_13 = arith.constant 0 : index
    %15 = vector.load %arg5[%c0_12, %c0_13] : memref<64x128xf32, #tpu.memory_space<vmem>>, vector<64x128xf32>
    %cst_14 = arith.constant dense<0.000000e+00> : vector<16x128xf32>
    %16 = tpu.matmul %14, %15, %cst_14 {dimension_numbers = #tpu.dot_dimension_numbers<[1], [0], [0], [1], [0, 0, 1, 1], [], []>} : vector<16x64xf32>, vector<64x128xf32>, vector<16x128xf32> -> vector<16x128xf32>
    %c0_15 = arith.constant 0 : index
    %c0_16 = arith.constant 0 : index
    %17 = vector.load %arg6[%c0_15, %c0_16] : memref<1x128xf32, #tpu.memory_space<vmem>>, vector<1x128xf32>
    %18 = vector.broadcast %17 : vector<1x128xf32> to vector<16x128xf32>
    %19 = arith.addf %16, %18 : vector<16x128xf32>
    %c0_17 = arith.constant 0 : index
    %c0_18 = arith.constant 0 : index
    %20 = vector.load %arg7[%c0_17, %c0_18] : memref<16x128xf32, #tpu.memory_space<vmem>>, vector<16x128xf32>
    tpu.vector_store %arg7[%c0_17, %c0_18], %19 {strides = array<i32>} : memref<16x128xf32, #tpu.memory_space<vmem>>, vector<16x128xf32>,
    return
  }
}

</mosaic_0001>

<llo_original>
// kernel: tpu_custom_call.1
$region0: #{tpu_custom_call.1}
  #allocation0 [shape = 'u32[]', space=smem, size = 0x4, offset = 0x4, fixed_abs, tag = 'smem constant byte address 0x4 - core index']
  #allocation1 [shape = 'u32[144,128]{1,0:T(1,128)}', space=vmem, size = 0x12000, scoped, tag = 'internal scratch']
  %s0 = inlined_call_operand.vmem [shape: bf16[16,1024], index: 0, kind: input, shape index: {}]
  %s1 = inlined_call_operand.vmem [shape: bf16[1024,16], index: 1, kind: input, shape index: {}]
  %s2 = inlined_call_operand.vmem [shape: f32[16,64], index: 2, kind: input, shape index: {}]
  %s3 = inlined_call_operand.vmem [shape: f32[16,64], index: 3, kind: input, shape index: {}]
  %s4 = inlined_call_operand.vmem [shape: f32[1,64], index: 4, kind: input, shape index: {}]
  %s5 = inlined_call_operand.vmem [shape: f32[64,128], index: 5, kind: input, shape index: {}]
  %s6 = inlined_call_operand.vmem [shape: f32[1,128], index: 6, kind: input, shape index: {}]
  %s7 = inlined_call_operand.hbm [shape: f32[16,128], index: 7, kind: output, shape index: {}]
  %s8 = sld [smem:[#allocation0]]
  $region38: #{tpu_custom_call.1} parent=0
    _
  %s10 = ssub.s32 1, %s8
  %s11 = scalar_select 0, %s10, %s8
  $region1: #{tpu_custom_call.1} parent=0
    #allocation2 [shape = 'u8[8192]{0}', space=vmem, size = 0x2000, scoped, tag = 'output window, operand 0, single buffered']
    #allocation3 [shape = 's32[1]{0}', space=sflag, size = 0x4, scoped, tag = 'scoped memory for tpu_custom_call.1']
    %12 = vsyncpa [#allocation3], 0
    // Predicated region
    $region2: #{tpu_custom_call.1} parent=1 // pred_check
      _
    $region3: #{tpu_custom_call.1} parent=1 // pred_check_branch
      %14 = sbr.rel (0) target = $region5
    $region4: #{tpu_custom_call.1} parent=1 // pred_region
      _
    $region5: #{tpu_custom_call.1} parent=1 // pred_fallthru
      _
    // Predicated region
    $region6: #{tpu_custom_call.1} parent=1 // pred_check
      _
    $region7: #{tpu_custom_call.1} parent=1 // pred_check_branch
      %16 = sbr.rel (0) target = $region9
    $region8: #{tpu_custom_call.1} parent=1 // pred_region
      _
    $region9: #{tpu_custom_call.1} parent=1 // pred_fallthru
      _
    // Predicated region
    $region10: #{tpu_custom_call.1} parent=1 // pred_check
      _
    $region11: #{tpu_custom_call.1} parent=1 // pred_check_branch
      %18 = sbr.rel (0) target = $region13
    $region12: #{tpu_custom_call.1} parent=1 // pred_region
      _
    $region13: #{tpu_custom_call.1} parent=1 // pred_fallthru
      _
    // Predicated region
    $region14: #{tpu_custom_call.1} parent=1 // pred_check
      _
    $region15: #{tpu_custom_call.1} parent=1 // pred_check_branch
      %20 = sbr.rel (0) target = $region17
    $region16: #{tpu_custom_call.1} parent=1 // pred_region
      _
    $region17: #{tpu_custom_call.1} parent=1 // pred_fallthru
      _
    // Predicated region
    $region18: #{tpu_custom_call.1} parent=1 // pred_check
      _
    $region19: #{tpu_custom_call.1} parent=1 // pred_check_branch
      %22 = sbr.rel (0) target = $region21
    $region20: #{tpu_custom_call.1} parent=1 // pred_region
      _
    $region21: #{tpu_custom_call.1} parent=1 // pred_fallthru
      _
    // Predicated region
    $region22: #{tpu_custom_call.1} parent=1 // pred_check
      _
    $region23: #{tpu_custom_call.1} parent=1 // pred_check_branch
      %24 = sbr.rel (0) target = $region25
    $region24: #{tpu_custom_call.1} parent=1 // pred_region
      _
    $region25: #{tpu_custom_call.1} parent=1 // pred_fallthru
      _
    // Predicated region
    $region26: #{tpu_custom_call.1} parent=1 // pred_check
      _
    $region27: #{tpu_custom_call.1} parent=1 // pred_check_branch
      %26 = sbr.rel (0) target = $region29
    $region28: #{tpu_custom_call.1} parent=1 // pred_region
      _
    $region29: #{tpu_custom_call.1} parent=1 // pred_fallthru
      _
    %v28 = vld [vmem:[%s0] sm:$0xff]
    %v29 = vld [vmem:[%s0 + $0x8] sm:$0xff]
    %v30 = vld [vmem:[%s0 + $0x10] sm:$0xff]
    %v31 = vld [vmem:[%s0 + $0x18] sm:$0xff]
    %v32 = vld [vmem:[%s0 + $0x20] sm:$0xff]
    %v33 = vld [vmem:[%s0 + $0x28] sm:$0xff]
    %v34 = vld [vmem:[%s0 + $0x30] sm:$0xff]
    %v35 = vld [vmem:[%s0 + $0x38] sm:$0xff]
    %v36 = vld [vmem:[%s1] sm:$0xf]
    %v37 = vld [vmem:[%s1 + $0x4] sm:$0xf]
    %v38 = vld [vmem:[%s1 + $0x8] sm:$0xf]
    %v39 = vld [vmem:[%s1 + $0xc] sm:$0xf]
    %v40 = vld [vmem:[%s1 + $0x10] sm:$0xf]
    %v41 = vld [vmem:[%s1 + $0x14] sm:$0xf]
    %v42 = vld [vmem:[%s1 + $0x18] sm:$0xf]
    %v43 = vld [vmem:[%s1 + $0x1c] sm:$0xf]
    %v44 = vld [vmem:[%s1 + $0x20] sm:$0xf]
    %v45 = vld [vmem:[%s1 + $0x24] sm:$0xf]
    %v46 = vld [vmem:[%s1 + $0x28] sm:$0xf]
    %v47 = vld [vmem:[%s1 + $0x2c] sm:$0xf]
    %v48 = vld [vmem:[%s1 + $0x30] sm:$0xf]
    %v49 = vld [vmem:[%s1 + $0x34] sm:$0xf]
    %v50 = vld [vmem:[%s1 + $0x38] sm:$0xf]
    %v51 = vld [vmem:[%s1 + $0x3c] sm:$0xf]
    %v52 = vld [vmem:[%s1 + $0x40] sm:$0xf]
    %v53 = vld [vmem:[%s1 + $0x44] sm:$0xf]
    %v54 = vld [vmem:[%s1 + $0x48] sm:$0xf]
    %v55 = vld [vmem:[%s1 + $0x4c] sm:$0xf]
    %v56 = vld [vmem:[%s1 + $0x50] sm:$0xf]
    %v57 = vld [vmem:[%s1 + $0x54] sm:$0xf]
    %v58 = vld [vmem:[%s1 + $0x58] sm:$0xf]
    %v59 = vld [vmem:[%s1 + $0x5c] sm:$0xf]
    %v60 = vld [vmem:[%s1 + $0x60] sm:$0xf]
    %v61 = vld [vmem:[%s1 + $0x64] sm:$0xf]
    %v62 = vld [vmem:[%s1 + $0x68] sm:$0xf]
    %v63 = vld [vmem:[%s1 + $0x6c] sm:$0xf]
    %v64 = vld [vmem:[%s1 + $0x70] sm:$0xf]
    %v65 = vld [vmem:[%s1 + $0x74] sm:$0xf]
    %v66 = vld [vmem:[%s1 + $0x78] sm:$0xf]
    %v67 = vld [vmem:[%s1 + $0x7c] sm:$0xf]
    %v68 = vld [vmem:[%s1 + $0x80] sm:$0xf]
    %v69 = vld [vmem:[%s1 + $0x84] sm:$0xf]
    %v70 = vld [vmem:[%s1 + $0x88] sm:$0xf]
    %v71 = vld [vmem:[%s1 + $0x8c] sm:$0xf]
    %v72 = vld [vmem:[%s1 + $0x90] sm:$0xf]
    %v73 = vld [vmem:[%s1 + $0x94] sm:$0xf]
    %v74 = vld [vmem:[%s1 + $0x98] sm:$0xf]
    %v75 = vld [vmem:[%s1 + $0x9c] sm:$0xf]
    %v76 = vld [vmem:[%s1 + $0xa0] sm:$0xf]
    %v77 = vld [vmem:[%s1 + $0xa4] sm:$0xf]
    %v78 = vld [vmem:[%s1 + $0xa8] sm:$0xf]
    %v79 = vld [vmem:[%s1 + $0xac] sm:$0xf]
    %v80 = vld [vmem:[%s1 + $0xb0] sm:$0xf]
    %v81 = vld [vmem:[%s1 + $0xb4] sm:$0xf]
    %v82 = vld [vmem:[%s1 + $0xb8] sm:$0xf]
    %v83 = vld [vmem:[%s1 + $0xbc] sm:$0xf]
    %v84 = vld [vmem:[%s1 + $0xc0] sm:$0xf]
    %v85 = vld [vmem:[%s1 + $0xc4] sm:$0xf]
    %v86 = vld [vmem:[%s1 + $0xc8] sm:$0xf]
    %v87 = vld [vmem:[%s1 + $0xcc] sm:$0xf]
    %v88 = vld [vmem:[%s1 + $0xd0] sm:$0xf]
    %v89 = vld [vmem:[%s1 + $0xd4] sm:$0xf]
    %v90 = vld [vmem:[%s1 + $0xd8] sm:$0xf]
    %v91 = vld [vmem:[%s1 + $0xdc] sm:$0xf]
    %v92 = vld [vmem:[%s1 + $0xe0] sm:$0xf]
    %v93 = vld [vmem:[%s1 + $0xe4] sm:$0xf]
    %v94 = vld [vmem:[%s1 + $0xe8] sm:$0xf]
    %v95 = vld [vmem:[%s1 + $0xec] sm:$0xf]
    %v96 = vld [vmem:[%s1 + $0xf0] sm:$0xf]
    %v97 = vld [vmem:[%s1 + $0xf4] sm:$0xf]
    %v98 = vld [vmem:[%s1 + $0xf8] sm:$0xf]
    %v99 = vld [vmem:[%s1 + $0xfc] sm:$0xf]
    %v100 = vld [vmem:[%s1 + $0x100] sm:$0xf]
    %v101 = vld [vmem:[%s1 + $0x104] sm:$0xf]
    %v102 = vld [vmem:[%s1 + $0x108] sm:$0xf]
    %v103 = vld [vmem:[%s1 + $0x10c] sm:$0xf]
    %v104 = vld [vmem:[%s1 + $0x110] sm:$0xf]
    %v105 = vld [vmem:[%s1 + $0x114] sm:$0xf]
    %v106 = vld [vmem:[%s1 + $0x118] sm:$0xf]
    %v107 = vld [vmem:[%s1 + $0x11c] sm:$0xf]
    %v108 = vld [vmem:[%s1 + $0x120] sm:$0xf]
    %v109 = vld [vmem:[%s1 + $0x124] sm:$0xf]
    %v110 = vld [vmem:[%s1 + $0x128] sm:$0xf]
    %v111 = vld [vmem:[%s1 + $0x12c] sm:$0xf]
    %v112 = vld [vmem:[%s1 + $0x130] sm:$0xf]
    %v113 = vld [vmem:[%s1 + $0x134] sm:$0xf]
    %v114 = vld [vmem:[%s1 + $0x138] sm:$0xf]
    %v115 = vld [vmem:[%s1 + $0x13c] sm:$0xf]
    %v116 = vld [vmem:[%s1 + $0x140] sm:$0xf]
    %v117 = vld [vmem:[%s1 + $0x144] sm:$0xf]
    %v118 = vld [vmem:[%s1 + $0x148] sm:$0xf]
    %v119 = vld [vmem:[%s1 + $0x14c] sm:$0xf]
    %v120 = vld [vmem:[%s1 + $0x150] sm:$0xf]
    %v121 = vld [vmem:[%s1 + $0x154] sm:$0xf]
    %v122 = vld [vmem:[%s1 + $0x158] sm:$0xf]
    %v123 = vld [vmem:[%s1 + $0x15c] sm:$0xf]
    %v124 = vld [vmem:[%s1 + $0x160] sm:$0xf]
    %v125 = vld [vmem:[%s1 + $0x164] sm:$0xf]
    %v126 = vld [vmem:[%s1 + $0x168] sm:$0xf]
    %v127 = vld [vmem:[%s1 + $0x16c] sm:$0xf]
    %v128 = vld [vmem:[%s1 + $0x170] sm:$0xf]
    %v129 = vld [vmem:[%s1 + $0x174] sm:$0xf]
    %v130 = vld [vmem:[%s1 + $0x178] sm:$0xf]
    %v131 = vld [vmem:[%s1 + $0x17c] sm:$0xf]
    %v132 = vld [vmem:[%s1 + $0x180] sm:$0xf]
    %v133 = vld [vmem:[%s1 + $0x184] sm:$0xf]
    %v134 = vld [vmem:[%s1 + $0x188] sm:$0xf]
    %v135 = vld [vmem:[%s1 + $0x18c] sm:$0xf]
    %v136 = vld [vmem:[%s1 + $0x190] sm:$0xf]
    %v137 = vld [vmem:[%s1 + $0x194] sm:$0xf]
    %v138 = vld [vmem:[%s1 + $0x198] sm:$0xf]
    %v139 = vld [vmem:[%s1 + $0x19c] sm:$0xf]
    %v140 = vld [vmem:[%s1 + $0x1a0] sm:$0xf]
    %v141 = vld [vmem:[%s1 + $0x1a4] sm:$0xf]
    %v142 = vld [vmem:[%s1 + $0x1a8] sm:$0xf]
    %v143 = vld [vmem:[%s1 + $0x1ac] sm:$0xf]
    %v144 = vld [vmem:[%s1 + $0x1b0] sm:$0xf]
    %v145 = vld [vmem:[%s1 + $0x1b4] sm:$0xf]
    %v146 = vld [vmem:[%s1 + $0x1b8] sm:$0xf]
    %v147 = vld [vmem:[%s1 + $0x1bc] sm:$0xf]
    %v148 = vld [vmem:[%s1 + $0x1c0] sm:$0xf]
    %v149 = vld [vmem:[%s1 + $0x1c4] sm:$0xf]
    %v150 = vld [vmem:[%s1 + $0x1c8] sm:$0xf]
    %v151 = vld [vmem:[%s1 + $0x1cc] sm:$0xf]
    %v152 = vld [vmem:[%s1 + $0x1d0] sm:$0xf]
    %v153 = vld [vmem:[%s1 + $0x1d4] sm:$0xf]
    %v154 = vld [vmem:[%s1 + $0x1d8] sm:$0xf]
    %v155 = vld [vmem:[%s1 + $0x1dc] sm:$0xf]
    %v156 = vld [vmem:[%s1 + $0x1e0] sm:$0xf]
    %v157 = vld [vmem:[%s1 + $0x1e4] sm:$0xf]
    %v158 = vld [vmem:[%s1 + $0x1e8] sm:$0xf]
    %v159 = vld [vmem:[%s1 + $0x1ec] sm:$0xf]
    %v160 = vld [vmem:[%s1 + $0x1f0] sm:$0xf]
    %v161 = vld [vmem:[%s1 + $0x1f4] sm:$0xf]
    %v162 = vld [vmem:[%s1 + $0x1f8] sm:$0xf]
    %v163 = vld [vmem:[%s1 + $0x1fc] sm:$0xf]
    %v172 = vunpack.c.l.b16 %v28
    %v173 = vunpack.c.h.b16 %v28
    %v174 = vunpack.c.l.b16 %v29
    %v175 = vunpack.c.h.b16 %v29
    %v176 = vunpack.c.l.b16 %v30
    %v177 = vunpack.c.h.b16 %v30
    %v178 = vunpack.c.l.b16 %v31
    %v179 = vunpack.c.h.b16 %v31
    %v180 = vunpack.c.l.b16 %v32
    %v181 = vunpack.c.h.b16 %v32
    %v182 = vunpack.c.l.b16 %v33
    %v183 = vunpack.c.h.b16 %v33
    %v184 = vunpack.c.l.b16 %v34
    %v185 = vunpack.c.h.b16 %v34
    %v186 = vunpack.c.l.b16 %v35
    %v187 = vunpack.c.h.b16 %v35
    %v188 = vpack.c.b16 %v180, %v172
    %v189 = vpack.c.b16 %v181, %v173
    %v190 = vpack.c.b16 %v182, %v174
    %v191 = vpack.c.b16 %v183, %v175
    %v192 = vpack.c.b16 %v184, %v176
    %v193 = vpack.c.b16 %v185, %v177
    %v194 = vpack.c.b16 %v186, %v178
    %v195 = vpack.c.b16 %v187, %v179
    %v332 = vunpack.c.l.b16 %v36
    %v333 = vunpack.c.l.b16 %v37
    %v334 = vunpack.c.l.b16 %v38
    %v335 = vunpack.c.l.b16 %v39
    %v336 = vunpack.c.l.b16 %v40
    %v337 = vunpack.c.l.b16 %v41
    %v338 = vunpack.c.l.b16 %v42
    %v339 = vunpack.c.l.b16 %v43
    %v340 = vunpack.c.l.b16 %v44
    %v341 = vunpack.c.l.b16 %v45
    %v342 = vunpack.c.l.b16 %v46
    %v343 = vunpack.c.l.b16 %v47
    %v344 = vunpack.c.l.b16 %v48
    %v345 = vunpack.c.l.b16 %v49
    %v346 = vunpack.c.l.b16 %v50
    %v347 = vunpack.c.l.b16 %v51
    %v348 = vunpack.c.l.b16 %v52
    %v349 = vunpack.c.l.b16 %v53
    %v350 = vunpack.c.l.b16 %v54
    %v351 = vunpack.c.l.b16 %v55
    %v352 = vunpack.c.l.b16 %v56
    %v353 = vunpack.c.l.b16 %v57
    %v354 = vunpack.c.l.b16 %v58
    %v355 = vunpack.c.l.b16 %v59
    %v356 = vunpack.c.l.b16 %v60
    %v357 = vunpack.c.l.b16 %v61
    %v358 = vunpack.c.l.b16 %v62
    %v359 = vunpack.c.l.b16 %v63
    %v360 = vunpack.c.l.b16 %v64
    %v361 = vunpack.c.l.b16 %v65
    %v362 = vunpack.c.l.b16 %v66
    %v363 = vunpack.c.l.b16 %v67
    %v364 = vunpack.c.l.b16 %v68
    %v365 = vunpack.c.l.b16 %v69
    %v366 = vunpack.c.l.b16 %v70
    %v367 = vunpack.c.l.b16 %v71
    %v368 = vunpack.c.l.b16 %v72
    %v369 = vunpack.c.l.b16 %v73
    %v370 = vunpack.c.l.b16 %v74
    %v371 = vunpack.c.l.b16 %v75
    %v372 = vunpack.c.l.b16 %v76
    %v373 = vunpack.c.l.b16 %v77
    %v374 = vunpack.c.l.b16 %v78
    %v375 = vunpack.c.l.b16 %v79
    %v376 = vunpack.c.l.b16 %v80
    %v377 = vunpack.c.l.b16 %v81
    %v378 = vunpack.c.l.b16 %v82
    %v379 = vunpack.c.l.b16 %v83
    %v380 = vunpack.c.l.b16 %v84
    %v381 = vunpack.c.l.b16 %v85
    %v382 = vunpack.c.l.b16 %v86
    %v383 = vunpack.c.l.b16 %v87
    %v384 = vunpack.c.l.b16 %v88
    %v385 = vunpack.c.l.b16 %v89
    %v386 = vunpack.c.l.b16 %v90
    %v387 = vunpack.c.l.b16 %v91
    %v388 = vunpack.c.l.b16 %v92
    %v389 = vunpack.c.l.b16 %v93
    %v390 = vunpack.c.l.b16 %v94
    %v391 = vunpack.c.l.b16 %v95
    %v392 = vunpack.c.l.b16 %v96
    %v393 = vunpack.c.l.b16 %v97
    %v394 = vunpack.c.l.b16 %v98
    %v395 = vunpack.c.l.b16 %v99
    %v396 = vunpack.c.l.b16 %v100
    %v397 = vunpack.c.l.b16 %v101
    %v398 = vunpack.c.l.b16 %v102
    %v399 = vunpack.c.l.b16 %v103
    %v400 = vunpack.c.l.b16 %v104
    %v401 = vunpack.c.l.b16 %v105
    %v402 = vunpack.c.l.b16 %v106
    %v403 = vunpack.c.l.b16 %v107
    %v404 = vunpack.c.l.b16 %v108
    %v405 = vunpack.c.l.b16 %v109
    %v406 = vunpack.c.l.b16 %v110
    %v407 = vunpack.c.l.b16 %v111
    %v408 = vunpack.c.l.b16 %v112
    %v409 = vunpack.c.l.b16 %v113
    %v410 = vunpack.c.l.b16 %v114
    %v411 = vunpack.c.l.b16 %v115
    %v412 = vunpack.c.l.b16 %v116
    %v413 = vunpack.c.l.b16 %v117
    %v414 = vunpack.c.l.b16 %v118
    %v415 = vunpack.c.l.b16 %v119
    %v416 = vunpack.c.l.b16 %v120
    %v417 = vunpack.c.l.b16 %v121
    %v418 = vunpack.c.l.b16 %v122
    %v419 = vunpack.c.l.b16 %v123
    %v420 = vunpack.c.l.b16 %v124
    %v421 = vunpack.c.l.b16 %v125
    %v422 = vunpack.c.l.b16 %v126
    %v423 = vunpack.c.l.b16 %v127
    %v424 = vunpack.c.l.b16 %v128
    %v425 = vunpack.c.l.b16 %v129
    %v426 = vunpack.c.l.b16 %v130
    %v427 = vunpack.c.l.b16 %v131
    %v428 = vunpack.c.l.b16 %v132
    %v429 = vunpack.c.l.b16 %v133
    %v430 = vunpack.c.l.b16 %v134
    %v431 = vunpack.c.l.b16 %v135
    %v432 = vunpack.c.l.b16 %v136
    %v433 = vunpack.c.l.b16 %v137
    %v434 = vunpack.c.l.b16 %v138
    %v435 = vunpack.c.l.b16 %v139
    %v436 = vunpack.c.l.b16 %v140
    %v437 = vunpack.c.l.b16 %v141
    %v438 = vunpack.c.l.b16 %v142
    %v439 = vunpack.c.l.b16 %v143
    %v440 = vunpack.c.l.b16 %v144
    %v441 = vunpack.c.l.b16 %v145
    %v442 = vunpack.c.l.b16 %v146
    %v443 = vunpack.c.l.b16 %v147
    %v444 = vunpack.c.l.b16 %v148
    %v445 = vunpack.c.l.b16 %v149
    %v446 = vunpack.c.l.b16 %v150
    %v447 = vunpack.c.l.b16 %v151
    %v448 = vunpack.c.l.b16 %v152
    %v449 = vunpack.c.l.b16 %v153
    %v450 = vunpack.c.l.b16 %v154
    %v451 = vunpack.c.l.b16 %v155
    %v452 = vunpack.c.l.b16 %v156
    %v453 = vunpack.c.l.b16 %v157
    %v454 = vunpack.c.l.b16 %v158
    %v455 = vunpack.c.l.b16 %v159
    %v456 = vunpack.c.l.b16 %v160
    %v457 = vunpack.c.l.b16 %v161
    %v458 = vunpack.c.l.b16 %v162
    %v459 = vunpack.c.l.b16 %v163
    %v460 = vpack.c.b16 %v333, %v332
    %v461 = vpack.c.b16 %v335, %v334
    %v462 = vpack.c.b16 %v337, %v336
    %v463 = vpack.c.b16 %v339, %v338
    %v464 = vpack.c.b16 %v341, %v340
    %v465 = vpack.c.b16 %v343, %v342
    %v466 = vpack.c.b16 %v345, %v344
    %v467 = vpack.c.b16 %v347, %v346
    %v468 = vpack.c.b16 %v349, %v348
    %v469 = vpack.c.b16 %v351, %v350
    %v470 = vpack.c.b16 %v353, %v352
    %v471 = vpack.c.b16 %v355, %v354
    %v472 = vpack.c.b16 %v357, %v356
    %v473 = vpack.c.b16 %v359, %v358
    %v474 = vpack.c.b16 %v361, %v360
    %v475 = vpack.c.b16 %v363, %v362
    %v476 = vpack.c.b16 %v365, %v364
    %v477 = vpack.c.b16 %v367, %v366
    %v478 = vpack.c.b16 %v369, %v368
    %v479 = vpack.c.b16 %v371, %v370
    %v480 = vpack.c.b16 %v373, %v372
    %v481 = vpack.c.b16 %v375, %v374
    %v482 = vpack.c.b16 %v377, %v376
    %v483 = vpack.c.b16 %v379, %v378
    %v484 = vpack.c.b16 %v381, %v380
    %v485 = vpack.c.b16 %v383, %v382
    %v486 = vpack.c.b16 %v385, %v384
    %v487 = vpack.c.b16 %v387, %v386
    %v488 = vpack.c.b16 %v389, %v388
    %v489 = vpack.c.b16 %v391, %v390
    %v490 = vpack.c.b16 %v393, %v392
    %v491 = vpack.c.b16 %v395, %v394
    %v492 = vpack.c.b16 %v397, %v396
    %v493 = vpack.c.b16 %v399, %v398
    %v494 = vpack.c.b16 %v401, %v400
    %v495 = vpack.c.b16 %v403, %v402
    %v496 = vpack.c.b16 %v405, %v404
    %v497 = vpack.c.b16 %v407, %v406
    %v498 = vpack.c.b16 %v409, %v408
    %v499 = vpack.c.b16 %v411, %v410
    %v500 = vpack.c.b16 %v413, %v412
    %v501 = vpack.c.b16 %v415, %v414
    %v502 = vpack.c.b16 %v417, %v416
    %v503 = vpack.c.b16 %v419, %v418
    %v504 = vpack.c.b16 %v421, %v420
    %v505 = vpack.c.b16 %v423, %v422
    %v506 = vpack.c.b16 %v425, %v424
    %v507 = vpack.c.b16 %v427, %v426
    %v508 = vpack.c.b16 %v429, %v428
    %v509 = vpack.c.b16 %v431, %v430
    %v510 = vpack.c.b16 %v433, %v432
    %v511 = vpack.c.b16 %v435, %v434
    %v512 = vpack.c.b16 %v437, %v436
    %v513 = vpack.c.b16 %v439, %v438
    %v514 = vpack.c.b16 %v441, %v440
    %v515 = vpack.c.b16 %v443, %v442
    %v516 = vpack.c.b16 %v445, %v444
    %v517 = vpack.c.b16 %v447, %v446
    %v518 = vpack.c.b16 %v449, %v448
    %v519 = vpack.c.b16 %v451, %v450
    %v520 = vpack.c.b16 %v453, %v452
    %v521 = vpack.c.b16 %v455, %v454
    %v522 = vpack.c.b16 %v457, %v456
    %v523 = vpack.c.b16 %v459, %v458
    %588 = vmatprep.subr.bf16.mxu0 0
    %589 = vmatpush1.bf16.msra.mxu0 %v467
    %590 = vmatprep.subr.bf16.mxu0 0
    %591 = vmatpush1.bf16.msra.mxu0 %v466
    %592 = vmatprep.subr.bf16.mxu0 0
    %593 = vmatpush1.bf16.msra.mxu0 %v465
    %594 = vmatprep.subr.bf16.mxu0 0
    %595 = vmatpush1.bf16.msra.mxu0 %v464
    %596 = vmatprep.subr.bf16.mxu0 0
    %597 = vmatpush1.bf16.msra.mxu0 %v463
    %598 = vmatprep.subr.bf16.mxu0 0
    %599 = vmatpush1.bf16.msra.mxu0 %v462
    %600 = vmatprep.subr.bf16.mxu0 0
    %601 = vmatpush1.bf16.msra.mxu0 %v461
    %602 = vmatprep.subr.bf16.mxu0 0
    %603 = vmatpush1.bf16.msra.mxu0 %v460
    %604 = vmatprep.subr.bf16.mxu0 0
    %605 = vmatpush2.bf16.msra.mxu0 %v475
    %606 = vmatprep.subr.bf16.mxu0 0
    %607 = vmatpush2.bf16.msra.mxu0 %v474
    %608 = vmatprep.subr.bf16.mxu0 0
    %609 = vmatpush2.bf16.msra.mxu0 %v473
    %610 = vmatprep.subr.bf16.mxu0 0
    %611 = vmatpush2.bf16.msra.mxu0 %v472
    %612 = vmatprep.subr.bf16.mxu0 0
    %613 = vmatpush2.bf16.msra.mxu0 %v471
    %614 = vmatprep.subr.bf16.mxu0 0
    %615 = vmatpush2.bf16.msra.mxu0 %v470
    %616 = vmatprep.subr.bf16.mxu0 0
    %617 = vmatpush2.bf16.msra.mxu0 %v469
    %618 = vmatprep.subr.bf16.mxu0 0
    %619 = vmatpush2.bf16.msra.mxu0 %v468
    %620 = vmatprep.mubr.bf16.mxu0 %v189
    %621 = vmatmul.mubr.bf16.gmra.mxu0 %v188
    %v622 = vpop.f32.mrf.mxu0
    %v623 = vadd.f32 0.0, %v622
    %v624 = vpop.f32.mrf.mxu0
    %v625 = vpop.f32.mrf.mxu0
    %v626 = vadd.f32 0.0, %v625
    %v627 = vpop.f32.mrf.mxu0
    %628 = vdwg.mxu0
    %629 = vmatprep.subr.bf16.mxu0 0
    %630 = vmatpush1.bf16.msra.mxu0 %v483
    %631 = vmatprep.subr.bf16.mxu0 0
    %632 = vmatpush1.bf16.msra.mxu0 %v482
    %633 = vmatprep.subr.bf16.mxu0 0
    %634 = vmatpush1.bf16.msra.mxu0 %v481
    %635 = vmatprep.subr.bf16.mxu0 0
    %636 = vmatpush1.bf16.msra.mxu0 %v480
    %637 = vmatprep.subr.bf16.mxu0 0
    %638 = vmatpush1.bf16.msra.mxu0 %v479
    %639 = vmatprep.subr.bf16.mxu0 0
    %640 = vmatpush1.bf16.msra.mxu0 %v478
    %641 = vmatprep.subr.bf16.mxu0 0
    %642 = vmatpush1.bf16.msra.mxu0 %v477
    %643 = vmatprep.subr.bf16.mxu0 0
    %644 = vmatpush1.bf16.msra.mxu0 %v476
    %645 = vmatprep.subr.bf16.mxu0 0
    %646 = vmatpush2.bf16.msra.mxu0 %v491
    %647 = vmatprep.subr.bf16.mxu0 0
    %648 = vmatpush2.bf16.msra.mxu0 %v490
    %649 = vmatprep.subr.bf16.mxu0 0
    %650 = vmatpush2.bf16.msra.mxu0 %v489
    %651 = vmatprep.subr.bf16.mxu0 0
    %652 = vmatpush2.bf16.msra.mxu0 %v488
    %653 = vmatprep.subr.bf16.mxu0 0
    %654 = vmatpush2.bf16.msra.mxu0 %v487
    %655 = vmatprep.subr.bf16.mxu0 0
    %656 = vmatpush2.bf16.msra.mxu0 %v486
    %657 = vmatprep.subr.bf16.mxu0 0
    %658 = vmatpush2.bf16.msra.mxu0 %v485
    %659 = vmatprep.subr.bf16.mxu0 0
    %660 = vmatpush2.bf16.msra.mxu0 %v484
    %661 = vmatprep.mubr.bf16.mxu0 %v191
    %662 = vmatmul.mubr.bf16.gmra.mxu0 %v190
    %v663 = vpop.f32.mrf.mxu0
    %v664 = vadd.f32 %v623, %v663
    %v665 = vpop.f32.mrf.mxu0
    %v666 = vpop.f32.mrf.mxu0
    %v667 = vadd.f32 %v626, %v666
    %v668 = vpop.f32.mrf.mxu0
    %669 = vdwg.mxu0
    %670 = vmatprep.subr.bf16.mxu0 0
    %671 = vmatpush1.bf16.msra.mxu0 %v499
    %672 = vmatprep.subr.bf16.mxu0 0
    %673 = vmatpush1.bf16.msra.mxu0 %v498
    %674 = vmatprep.subr.bf16.mxu0 0
    %675 = vmatpush1.bf16.msra.mxu0 %v497
    %676 = vmatprep.subr.bf16.mxu0 0
    %677 = vmatpush1.bf16.msra.mxu0 %v496
    %678 = vmatprep.subr.bf16.mxu0 0
    %679 = vmatpush1.bf16.msra.mxu0 %v495
    %680 = vmatprep.subr.bf16.mxu0 0
    %681 = vmatpush1.bf16.msra.mxu0 %v494
    %682 = vmatprep.subr.bf16.mxu0 0
    %683 = vmatpush1.bf16.msra.mxu0 %v493
    %684 = vmatprep.subr.bf16.mxu0 0
    %685 = vmatpush1.bf16.msra.mxu0 %v492
    %686 = vmatprep.subr.bf16.mxu0 0
    %687 = vmatpush2.bf16.msra.mxu0 %v507
    %688 = vmatprep.subr.bf16.mxu0 0
    %689 = vmatpush2.bf16.msra.mxu0 %v506
    %690 = vmatprep.subr.bf16.mxu0 0
    %691 = vmatpush2.bf16.msra.mxu0 %v505
    %692 = vmatprep.subr.bf16.mxu0 0
    %693 = vmatpush2.bf16.msra.mxu0 %v504
    %694 = vmatprep.subr.bf16.mxu0 0
    %695 = vmatpush2.bf16.msra.mxu0 %v503
    %696 = vmatprep.subr.bf16.mxu0 0
    %697 = vmatpush2.bf16.msra.mxu0 %v502
    %698 = vmatprep.subr.bf16.mxu0 0
    %699 = vmatpush2.bf16.msra.mxu0 %v501
    %700 = vmatprep.subr.bf16.mxu0 0
    %701 = vmatpush2.bf16.msra.mxu0 %v500
    %702 = vmatprep.mubr.bf16.mxu0 %v193
    %703 = vmatmul.mubr.bf16.gmra.mxu0 %v192
    %v704 = vpop.f32.mrf.mxu0
    %v705 = vadd.f32 %v664, %v704
    %v706 = vpop.f32.mrf.mxu0
    %v707 = vpop.f32.mrf.mxu0
    %v708 = vadd.f32 %v667, %v707
    %v709 = vpop.f32.mrf.mxu0
    %710 = vdwg.mxu0
    %711 = vmatprep.subr.bf16.mxu0 0
    %712 = vmatpush1.bf16.msra.mxu0 %v515
    %713 = vmatprep.subr.bf16.mxu0 0
    %714 = vmatpush1.bf16.msra.mxu0 %v514
    %715 = vmatprep.subr.bf16.mxu0 0
    %716 = vmatpush1.bf16.msra.mxu0 %v513
    %717 = vmatprep.subr.bf16.mxu0 0
    %718 = vmatpush1.bf16.msra.mxu0 %v512
    %719 = vmatprep.subr.bf16.mxu0 0
    %720 = vmatpush1.bf16.msra.mxu0 %v511
    %721 = vmatprep.subr.bf16.mxu0 0
    %722 = vmatpush1.bf16.msra.mxu0 %v510
    %723 = vmatprep.subr.bf16.mxu0 0
    %724 = vmatpush1.bf16.msra.mxu0 %v509
    %725 = vmatprep.subr.bf16.mxu0 0
    %726 = vmatpush1.bf16.msra.mxu0 %v508
    %727 = vmatprep.subr.bf16.mxu0 0
    %728 = vmatpush2.bf16.msra.mxu0 %v523
    %729 = vmatprep.subr.bf16.mxu0 0
    %730 = vmatpush2.bf16.msra.mxu0 %v522
    %731 = vmatprep.subr.bf16.mxu0 0
    %732 = vmatpush2.bf16.msra.mxu0 %v521
    %733 = vmatprep.subr.bf16.mxu0 0
    %734 = vmatpush2.bf16.msra.mxu0 %v520
    %735 = vmatprep.subr.bf16.mxu0 0
    %736 = vmatpush2.bf16.msra.mxu0 %v519
    %737 = vmatprep.subr.bf16.mxu0 0
    %738 = vmatpush2.bf16.msra.mxu0 %v518
    %739 = vmatprep.subr.bf16.mxu0 0
    %740 = vmatpush2.bf16.msra.mxu0 %v517
    %741 = vmatprep.subr.bf16.mxu0 0
    %742 = vmatpush2.bf16.msra.mxu0 %v516
    %743 = vmatprep.mubr.bf16.mxu0 %v195
    %744 = vmatmul.mubr.bf16.gmra.mxu0 %v194
    %v745 = vpop.f32.mrf.mxu0
    %v746 = vadd.f32 %v705, %v745
    %v747 = vpop.f32.mrf.mxu0
    %v748 = vpop.f32.mrf.mxu0
    %v749 = vadd.f32 %v708, %v748
    %v750 = vpop.f32.mrf.mxu0
    %751 = vdwg.mxu0
    %v752 = vand.u32 2147483647, %v746
    %vm753 = vcmp.le.f32.partialorder %v752, 0.7853982
    %vm754 = vcmp.lt.s32.totalorder %v746, 0
    %v755 = vand.u32 %v746, 2139095040
    %v756 = vshrl.u32 %v755, 23
    %v757 = vsub.s32 %v756, 127
    %v758 = vand.u32 2147483647, %v746
    %v759 = vand.u32 %v758, 8388607
    %v760 = vor.u32 %v759, 8388608
    %v761 = vsub.s32 0, %v760
    %v762 = vadd.s32 %v757, 1
    %vm763 = vcmp.gt.s32.totalorder %v762, 0
    %v764 = vsel %vm763, %v762, 0
    %v765 = vshrl.u32 %v764, 5
    %v766 = vand.u32 %v764, 31
    %v767 = vsub.s32 32, %v766
    %v768 = vshrl.u32 683565275, %v767
    %v769 = vshll.u32 683565275, %v766
    %v770 = vshrl.u32 2475754826, %v767
    %v771 = vor.u32 %v769, %v770
    %v772 = vshll.u32 2475754826, %v766
    %v773 = vshrl.u32 2131351028, %v767
    %v774 = vor.u32 %v772, %v773
    %v775 = vshll.u32 2131351028, %v766
    %v776 = vshrl.u32 2102212464, %v767
    %v777 = vor.u32 %v775, %v776
    %v778 = vshll.u32 2102212464, %v766
    %v779 = vshrl.u32 920167782, %v767
    %v780 = vor.u32 %v778, %v779
    %v781 = vshll.u32 920167782, %v766
    %v782 = vshrl.u32 1326507024, %v767
    %v783 = vor.u32 %v781, %v782
    %vm784 = vcmp.lt.s32.totalorder %v765, 1
    %vm785 = vcmp.lt.s32.totalorder %v765, 2
    %vm786 = vcmp.lt.s32.totalorder %v765, 3
    %vm787 = vcmp.lt.s32.totalorder %v765, 4
    %v788 = vsel %vm784, %v768, %v771
    %v789 = vsel %vm787, %v777, 2102212464
    %v790 = vsel %vm786, %v774, %v789
    %v791 = vsel %vm785, %v788, %v790
    %v792 = vsel %vm784, %v771, %v774
    %v793 = vsel %vm787, %v780, 920167782
    %v794 = vsel %vm786, %v777, %v793
    %v795 = vsel %vm785, %v792, %v794
    %v796 = vsel %vm784, %v774, %v777
    %v797 = vsel %vm787, %v783, 1326507024
    %v798 = vsel %vm786, %v780, %v797
    %v799 = vsel %vm785, %v796, %v798
    %v800 = vshll.u32 %v760, 8
    %v801 = vmul.u32.u64.compose %v800, %v799
    %v802 = vextract.low.u32 %v801
    %v803 = vextract.high.u32 %v801
    %v804 = vmul.u32.u64.compose %v800, %v795
    %v805 = vextract.low.u32 %v804
    %v806 = vextract.high.u32 %v804
    %v807 = vmul.u32 %v800, %v791
    %v808 = vadd.s32 %v803, %v805
    %vm809 = vc.u32 %v803, %v805
    %v810 = vadd.s32 %v806, 1
    %v811 = vsel %vm809, %v810, %v806
    %v812 = vadd.s32 %v807, %v811
    %v813 = vadd.s32 %v812, 536870912
    %v814 = vshrl.u32 %v813, 30
    %v815 = vshll.u32 %v814, 30
    %v816 = vsub.s32 %v812, %v815
    %vm817 = vcmp.lt.s32.totalorder %v816, 0
    %v818 = vsub.s32 0, %v816
    %v819 = vsel %vm817, %v818, %v816
    %v820 = vclz %v819
    %v821 = vsub.s32 %v820, 2
    %vm822 = vcmp.gt.s32.totalorder 0, %v821
    %v823 = vsel %vm822, 0, %v821
    %v824 = vsub.s32 32, %v823
    %v825 = vshll.u32 %v816, %v823
    %v826 = vshrl.u32 %v808, %v824
    %v827 = vor.u32 %v825, %v826
    %v828 = vsub.s32 4294967266, %v823
    %v829 = vadd.s32 %v828, 127
    %v830 = vshll.u32 %v829, 23
    %v831 = vor.u32 4788187, %v830
    %v832 = vand.u32 2147483647, %v831
    %v834 = vcvt.s32.f32 %v827
    %v835 = vmul.f32 %v834, %v832
    %v836 = vxor.u32 %v835, 2147483648
    %v837 = vsel %vm754, %v836, %v835
    %v838 = vsub.s32 4, %v814
    %v839 = vsel %vm754, %v838, %v814
    %v840 = vsel %vm753, %v746, %v837
    %v841 = vsel %vm753, 0, %v839
    %v842 = vcosq.f32.pop %v840
    %v843 = vsinq.f32.pop %v840
    %vm844 = vweird.f32 %v746
    %v845 = vand.u32 %v841, 3
    %vm846 = vcmp.lt.s32.totalorder %v845, 2
    %vm847 = vcmp.eq.s32.totalorder %v845, 0
    %v848 = vxor.u32 %v843, 2147483648
    %v849 = vsel %vm847, %v842, %v848
    %vm850 = vcmp.eq.s32.totalorder %v845, 2
    %v851 = vxor.u32 %v842, 2147483648
    %v852 = vsel %vm850, %v851, %v843
    %v853 = vsel %vm846, %v849, %v852
    %v854 = vsel %vm844, nan, %v853
    %v855 = vand.u32 2147483647, %v749
    %vm856 = vcmp.le.f32.partialorder %v855, 0.7853982
    %vm857 = vcmp.lt.s32.totalorder %v749, 0
    %v858 = vand.u32 %v749, 2139095040
    %v859 = vshrl.u32 %v858, 23
    %v860 = vsub.s32 %v859, 127
    %v861 = vand.u32 2147483647, %v749
    %v862 = vand.u32 %v861, 8388607
    %v863 = vor.u32 %v862, 8388608
    %v864 = vsub.s32 0, %v863
    %v865 = vadd.s32 %v860, 1
    %vm866 = vcmp.gt.s32.totalorder %v865, 0
    %v867 = vsel %vm866, %v865, 0
    %v868 = vshrl.u32 %v867, 5
    %v869 = vand.u32 %v867, 31
    %v870 = vsub.s32 32, %v869
    %v871 = vshrl.u32 683565275, %v870
    %v872 = vshll.u32 683565275, %v869
    %v873 = vshrl.u32 2475754826, %v870
    %v874 = vor.u32 %v872, %v873
    %v875 = vshll.u32 2475754826, %v869
    %v876 = vshrl.u32 2131351028, %v870
    %v877 = vor.u32 %v875, %v876
    %v878 = vshll.u32 2131351028, %v869
    %v879 = vshrl.u32 2102212464, %v870
    %v880 = vor.u32 %v878, %v879
    %v881 = vshll.u32 2102212464, %v869
    %v882 = vshrl.u32 920167782, %v870
    %v883 = vor.u32 %v881, %v882
    %v884 = vshll.u32 920167782, %v869
    %v885 = vshrl.u32 1326507024, %v870
    %v886 = vor.u32 %v884, %v885
    %vm887 = vcmp.lt.s32.totalorder %v868, 1
    %vm888 = vcmp.lt.s32.totalorder %v868, 2
    %vm889 = vcmp.lt.s32.totalorder %v868, 3
    %vm890 = vcmp.lt.s32.totalorder %v868, 4
    %v891 = vsel %vm887, %v871, %v874
    %v892 = vsel %vm890, %v880, 2102212464
    %v893 = vsel %vm889, %v877, %v892
    %v894 = vsel %vm888, %v891, %v893
    %v895 = vsel %vm887, %v874, %v877
    %v896 = vsel %vm890, %v883, 920167782
    %v897 = vsel %vm889, %v880, %v896
    %v898 = vsel %vm888, %v895, %v897
    %v899 = vsel %vm887, %v877, %v880
    %v900 = vsel %vm890, %v886, 1326507024
    %v901 = vsel %vm889, %v883, %v900
    %v902 = vsel %vm888, %v899, %v901
    %v903 = vshll.u32 %v863, 8
    %v904 = vmul.u32.u64.compose %v903, %v902
    %v905 = vextract.low.u32 %v904
    %v906 = vextract.high.u32 %v904
    %v907 = vmul.u32.u64.compose %v903, %v898
    %v908 = vextract.low.u32 %v907
    %v909 = vextract.high.u32 %v907
    %v910 = vmul.u32 %v903, %v894
    %v911 = vadd.s32 %v906, %v908
    %vm912 = vc.u32 %v906, %v908
    %v913 = vadd.s32 %v909, 1
    %v914 = vsel %vm912, %v913, %v909
    %v915 = vadd.s32 %v910, %v914
    %v916 = vadd.s32 %v915, 536870912
    %v917 = vshrl.u32 %v916, 30
    %v918 = vshll.u32 %v917, 30
    %v919 = vsub.s32 %v915, %v918
    %vm920 = vcmp.lt.s32.totalorder %v919, 0
    %v921 = vsub.s32 0, %v919
    %v922 = vsel %vm920, %v921, %v919
    %v923 = vclz %v922
    %v924 = vsub.s32 %v923, 2
    %vm925 = vcmp.gt.s32.totalorder 0, %v924
    %v926 = vsel %vm925, 0, %v924
    %v927 = vsub.s32 32, %v926
    %v928 = vshll.u32 %v919, %v926
    %v929 = vshrl.u32 %v911, %v927
    %v930 = vor.u32 %v928, %v929
    %v931 = vsub.s32 4294967266, %v926
    %v932 = vadd.s32 %v931, 127
    %v933 = vshll.u32 %v932, 23
    %v934 = vor.u32 4788187, %v933
    %v935 = vand.u32 2147483647, %v934
    %v937 = vcvt.s32.f32 %v930
    %v938 = vmul.f32 %v937, %v935
    %v939 = vxor.u32 %v938, 2147483648
    %v940 = vsel %vm857, %v939, %v938
    %v941 = vsub.s32 4, %v917
    %v942 = vsel %vm857, %v941, %v917
    %v943 = vsel %vm856, %v749, %v940
    %v944 = vsel %vm856, 0, %v942
    %v945 = vcosq.f32.pop %v943
    %v946 = vsinq.f32.pop %v943
    %vm947 = vweird.f32 %v749
    %v948 = vand.u32 %v944, 3
    %vm949 = vcmp.lt.s32.totalorder %v948, 2
    %vm950 = vcmp.eq.s32.totalorder %v948, 0
    %v951 = vxor.u32 %v946, 2147483648
    %v952 = vsel %vm950, %v945, %v951
    %vm953 = vcmp.eq.s32.totalorder %v948, 2
    %v954 = vxor.u32 %v945, 2147483648
    %v955 = vsel %vm953, %v954, %v946
    %v956 = vsel %vm949, %v952, %v955
    %v957 = vsel %vm947, nan, %v956
    %v958 = vand.u32 2147483647, %v746
    %vm959 = vcmp.le.f32.partialorder %v958, 0.7853982
    %vm960 = vcmp.lt.s32.totalorder %v746, 0
    %v961 = vand.u32 %v746, 2139095040
    %v962 = vshrl.u32 %v961, 23
    %v963 = vsub.s32 %v962, 127
    %v964 = vand.u32 2147483647, %v746
    %v965 = vand.u32 %v964, 8388607
    %v966 = vor.u32 %v965, 8388608
    %v967 = vsub.s32 0, %v966
    %v968 = vadd.s32 %v963, 1
    %vm969 = vcmp.gt.s32.totalorder %v968, 0
    %v970 = vsel %vm969, %v968, 0
    %v971 = vshrl.u32 %v970, 5
    %v972 = vand.u32 %v970, 31
    %v973 = vsub.s32 32, %v972
    %v974 = vshrl.u32 683565275, %v973
    %v975 = vshll.u32 683565275, %v972
    %v976 = vshrl.u32 2475754826, %v973
    %v977 = vor.u32 %v975, %v976
    %v978 = vshll.u32 2475754826, %v972
    %v979 = vshrl.u32 2131351028, %v973
    %v980 = vor.u32 %v978, %v979
    %v981 = vshll.u32 2131351028, %v972
    %v982 = vshrl.u32 2102212464, %v973
    %v983 = vor.u32 %v981, %v982
    %v984 = vshll.u32 2102212464, %v972
    %v985 = vshrl.u32 920167782, %v973
    %v986 = vor.u32 %v984, %v985
    %v987 = vshll.u32 920167782, %v972
    %v988 = vshrl.u32 1326507024, %v973
    %v989 = vor.u32 %v987, %v988
    %vm990 = vcmp.lt.s32.totalorder %v971, 1
    %vm991 = vcmp.lt.s32.totalorder %v971, 2
    %vm992 = vcmp.lt.s32.totalorder %v971, 3
    %vm993 = vcmp.lt.s32.totalorder %v971, 4
    %v994 = vsel %vm990, %v974, %v977
    %v995 = vsel %vm993, %v983, 2102212464
    %v996 = vsel %vm992, %v980, %v995
    %v997 = vsel %vm991, %v994, %v996
    %v998 = vsel %vm990, %v977, %v980
    %v999 = vsel %vm993, %v986, 920167782
    %v1000 = vsel %vm992, %v983, %v999
    %v1001 = vsel %vm991, %v998, %v1000
    %v1002 = vsel %vm990, %v980, %v983
    %v1003 = vsel %vm993, %v989, 1326507024
    %v1004 = vsel %vm992, %v986, %v1003
    %v1005 = vsel %vm991, %v1002, %v1004
    %v1006 = vshll.u32 %v966, 8
    %v1007 = vmul.u32.u64.compose %v1006, %v1005
    %v1008 = vextract.low.u32 %v1007
    %v1009 = vextract.high.u32 %v1007
    %v1010 = vmul.u32.u64.compose %v1006, %v1001
    %v1011 = vextract.low.u32 %v1010
    %v1012 = vextract.high.u32 %v1010
    %v1013 = vmul.u32 %v1006, %v997
    %v1014 = vadd.s32 %v1009, %v1011
    %vm1015 = vc.u32 %v1009, %v1011
    %v1016 = vadd.s32 %v1012, 1
    %v1017 = vsel %vm1015, %v1016, %v1012
    %v1018 = vadd.s32 %v1013, %v1017
    %v1019 = vadd.s32 %v1018, 536870912
    %v1020 = vshrl.u32 %v1019, 30
    %v1021 = vshll.u32 %v1020, 30
    %v1022 = vsub.s32 %v1018, %v1021
    %vm1023 = vcmp.lt.s32.totalorder %v1022, 0
    %v1024 = vsub.s32 0, %v1022
    %v1025 = vsel %vm1023, %v1024, %v1022
    %v1026 = vclz %v1025
    %v1027 = vsub.s32 %v1026, 2
    %vm1028 = vcmp.gt.s32.totalorder 0, %v1027
    %v1029 = vsel %vm1028, 0, %v1027
    %v1030 = vsub.s32 32, %v1029
    %v1031 = vshll.u32 %v1022, %v1029
    %v1032 = vshrl.u32 %v1014, %v1030
    %v1033 = vor.u32 %v1031, %v1032
    %v1034 = vsub.s32 4294967266, %v1029
    %v1035 = vadd.s32 %v1034, 127
    %v1036 = vshll.u32 %v1035, 23
    %v1037 = vor.u32 4788187, %v1036
    %v1038 = vand.u32 2147483647, %v1037
    %v1040 = vcvt.s32.f32 %v1033
    %v1041 = vmul.f32 %v1040, %v1038
    %v1042 = vxor.u32 %v1041, 2147483648
    %v1043 = vsel %vm960, %v1042, %v1041
    %v1044 = vsub.s32 4, %v1020
    %v1045 = vsel %vm960, %v1044, %v1020
    %v1046 = vsel %vm959, %v746, %v1043
    %v1047 = vsel %vm959, 0, %v1045
    %v1048 = vcosq.f32.pop %v1046
    %v1049 = vsinq.f32.pop %v1046
    %vm1050 = vweird.f32 %v746
    %v1051 = vadd.s32 %v1047, 3
    %v1052 = vand.u32 %v1051, 3
    %vm1053 = vcmp.lt.s32.totalorder %v1052, 2
    %vm1054 = vcmp.eq.s32.totalorder %v1052, 0
    %v1055 = vxor.u32 %v1049, 2147483648
    %v1056 = vsel %vm1054, %v1048, %v1055
    %vm1057 = vcmp.eq.s32.totalorder %v1052, 2
    %v1058 = vxor.u32 %v1048, 2147483648
    %v1059 = vsel %vm1057, %v1058, %v1049
    %v1060 = vsel %vm1053, %v1056, %v1059
    %v1061 = vsel %vm1050, nan, %v1060
    %v1062 = vand.u32 2147483647, %v749
    %vm1063 = vcmp.le.f32.partialorder %v1062, 0.7853982
    %vm1064 = vcmp.lt.s32.totalorder %v749, 0
    %v1065 = vand.u32 %v749, 2139095040
    %v1066 = vshrl.u32 %v1065, 23
    %v1067 = vsub.s32 %v1066, 127
    %v1068 = vand.u32 2147483647, %v749
    %v1069 = vand.u32 %v1068, 8388607
    %v1070 = vor.u32 %v1069, 8388608
    %v1071 = vsub.s32 0, %v1070
    %v1072 = vadd.s32 %v1067, 1
    %vm1073 = vcmp.gt.s32.totalorder %v1072, 0
    %v1074 = vsel %vm1073, %v1072, 0
    %v1075 = vshrl.u32 %v1074, 5
    %v1076 = vand.u32 %v1074, 31
    %v1077 = vsub.s32 32, %v1076
    %v1078 = vshrl.u32 683565275, %v1077
    %v1079 = vshll.u32 683565275, %v1076
    %v1080 = vshrl.u32 2475754826, %v1077
    %v1081 = vor.u32 %v1079, %v1080
    %v1082 = vshll.u32 2475754826, %v1076
    %v1083 = vshrl.u32 2131351028, %v1077
    %v1084 = vor.u32 %v1082, %v1083
    %v1085 = vshll.u32 2131351028, %v1076
    %v1086 = vshrl.u32 2102212464, %v1077
    %v1087 = vor.u32 %v1085, %v1086
    %v1088 = vshll.u32 2102212464, %v1076
    %v1089 = vshrl.u32 920167782, %v1077
    %v1090 = vor.u32 %v1088, %v1089
    %v1091 = vshll.u32 920167782, %v1076
    %v1092 = vshrl.u32 1326507024, %v1077
    %v1093 = vor.u32 %v1091, %v1092
    %vm1094 = vcmp.lt.s32.totalorder %v1075, 1
    %vm1095 = vcmp.lt.s32.totalorder %v1075, 2
    %vm1096 = vcmp.lt.s32.totalorder %v1075, 3
    %vm1097 = vcmp.lt.s32.totalorder %v1075, 4
    %v1098 = vsel %vm1094, %v1078, %v1081
    %v1099 = vsel %vm1097, %v1087, 2102212464
    %v1100 = vsel %vm1096, %v1084, %v1099
    %v1101 = vsel %vm1095, %v1098, %v1100
    %v1102 = vsel %vm1094, %v1081, %v1084
    %v1103 = vsel %vm1097, %v1090, 920167782
    %v1104 = vsel %vm1096, %v1087, %v1103
    %v1105 = vsel %vm1095, %v1102, %v1104
    %v1106 = vsel %vm1094, %v1084, %v1087
    %v1107 = vsel %vm1097, %v1093, 1326507024
    %v1108 = vsel %vm1096, %v1090, %v1107
    %v1109 = vsel %vm1095, %v1106, %v1108
    %v1110 = vshll.u32 %v1070, 8
    %v1111 = vmul.u32.u64.compose %v1110, %v1109
    %v1112 = vextract.low.u32 %v1111
    %v1113 = vextract.high.u32 %v1111
    %v1114 = vmul.u32.u64.compose %v1110, %v1105
    %v1115 = vextract.low.u32 %v1114
    %v1116 = vextract.high.u32 %v1114
    %v1117 = vmul.u32 %v1110, %v1101
    %v1118 = vadd.s32 %v1113, %v1115
    %vm1119 = vc.u32 %v1113, %v1115
    %v1120 = vadd.s32 %v1116, 1
    %v1121 = vsel %vm1119, %v1120, %v1116
    %v1122 = vadd.s32 %v1117, %v1121
    %v1123 = vadd.s32 %v1122, 536870912
    %v1124 = vshrl.u32 %v1123, 30
    %v1125 = vshll.u32 %v1124, 30
    %v1126 = vsub.s32 %v1122, %v1125
    %vm1127 = vcmp.lt.s32.totalorder %v1126, 0
    %v1128 = vsub.s32 0, %v1126
    %v1129 = vsel %vm1127, %v1128, %v1126
    %v1130 = vclz %v1129
    %v1131 = vsub.s32 %v1130, 2
    %vm1132 = vcmp.gt.s32.totalorder 0, %v1131
    %v1133 = vsel %vm1132, 0, %v1131
    %v1134 = vsub.s32 32, %v1133
    %v1135 = vshll.u32 %v1126, %v1133
    %v1136 = vshrl.u32 %v1118, %v1134
    %v1137 = vor.u32 %v1135, %v1136
    %v1138 = vsub.s32 4294967266, %v1133
    %v1139 = vadd.s32 %v1138, 127
    %v1140 = vshll.u32 %v1139, 23
    %v1141 = vor.u32 4788187, %v1140
    %v1142 = vand.u32 2147483647, %v1141
    %v1144 = vcvt.s32.f32 %v1137
    %v1145 = vmul.f32 %v1144, %v1142
    %v1146 = vxor.u32 %v1145, 2147483648
    %v1147 = vsel %vm1064, %v1146, %v1145
    %v1148 = vsub.s32 4, %v1124
    %v1149 = vsel %vm1064, %v1148, %v1124
    %v1150 = vsel %vm1063, %v749, %v1147
    %v1151 = vsel %vm1063, 0, %v1149
    %v1152 = vcosq.f32.pop %v1150
    %v1153 = vsinq.f32.pop %v1150
    %vm1154 = vweird.f32 %v749
    %v1155 = vadd.s32 %v1151, 3
    %v1156 = vand.u32 %v1155, 3
    %vm1157 = vcmp.lt.s32.totalorder %v1156, 2
    %vm1158 = vcmp.eq.s32.totalorder %v1156, 0
    %v1159 = vxor.u32 %v1153, 2147483648
    %v1160 = vsel %vm1158, %v1152, %v1159
    %vm1161 = vcmp.eq.s32.totalorder %v1156, 2
    %v1162 = vxor.u32 %v1152, 2147483648
    %v1163 = vsel %vm1161, %v1162, %v1153
    %v1164 = vsel %vm1157, %v1160, %v1163
    %v1165 = vsel %vm1154, nan, %v1164
    %v1166 = vld [vmem:[%s2] sm:$0xff]
    %v1167 = vld [vmem:[%s2 + $0x8] sm:$0xff]
    %v1168 = vld [vmem:[%s3] sm:$0xff]
    %v1169 = vld [vmem:[%s3 + $0x8] sm:$0xff]
    %vm1170 = vcmask 130048
    %v1172 = vsel %vm1170, %v1061, 0
    %v1175 = vsel %vm1170, %v1165, 0
    %1177 = vmatprep.subr.mxu0 0.0
    %1178 = vmatpush1.msra.mxu0 0.0
    %1179 = vmatprep.subr.mxu0 0.0
    %1180 = vmatpush1.msra.mxu0 0.0
    %1181 = vmatprep.subr.mxu0 0.0
    %1182 = vmatpush1.msra.mxu0 0.0
    %1183 = vmatprep.subr.mxu0 0.0
    %1184 = vmatpush1.msra.mxu0 0.0
    %1185 = vmatprep.subr.mxu0 0.0
    %1186 = vmatpush1.msra.mxu0 0.0
    %1187 = vmatprep.subr.mxu0 0.0
    %1188 = vmatpush1.msra.mxu0 0.0
    %1189 = vmatprep.subr.mxu0 0.0
    %1190 = vmatpush1.msra.mxu0 0.0
    %1191 = vmatprep.subr.mxu0 0.0
    %1192 = vmatpush1.msra.mxu0 0.0
    %1193 = vmatprep.subr.mxu0 0.0
    %1194 = vmatpush1.msra.mxu0 0.0
    %1195 = vmatprep.subr.mxu0 0.0
    %1196 = vmatpush1.msra.mxu0 0.0
    %1197 = vmatprep.subr.mxu0 0.0
    %1198 = vmatpush1.msra.mxu0 0.0
    %1199 = vmatprep.subr.mxu0 0.0
    %1200 = vmatpush1.msra.mxu0 0.0
    %1201 = vmatprep.subr.mxu0 0.0
    %1202 = vmatpush1.msra.mxu0 0.0
    %1203 = vmatprep.subr.mxu0 0.0
    %1204 = vmatpush1.msra.mxu0 0.0
    %1205 = vmatprep.subr.mxu0 0.0
    %1206 = vmatpush1.msra.mxu0 %v1169
    %1207 = vmatprep.subr.mxu0 0.0
    %1208 = vmatpush1.msra.mxu0 %v1168
    %1209 = vmatprep.subr.mxu0 0.0
    %1210 = vmatpush2.msra.mxu0 0.0
    %1211 = vmatprep.subr.mxu0 0.0
    %1212 = vmatpush2.msra.mxu0 0.0
    %1213 = vmatprep.subr.mxu0 0.0
    %1214 = vmatpush2.msra.mxu0 0.0
    %1215 = vmatprep.subr.mxu0 0.0
    %1216 = vmatpush2.msra.mxu0 0.0
    %1217 = vmatprep.subr.mxu0 0.0
    %1218 = vmatpush2.msra.mxu0 0.0
    %1219 = vmatprep.subr.mxu0 0.0
    %1220 = vmatpush2.msra.mxu0 0.0
    %1221 = vmatprep.subr.mxu0 0.0
    %1222 = vmatpush2.msra.mxu0 0.0
    %1223 = vmatprep.subr.mxu0 0.0
    %1224 = vmatpush2.msra.mxu0 0.0
    %1225 = vmatprep.subr.mxu0 0.0
    %1226 = vmatpush2.msra.mxu0 0.0
    %1227 = vmatprep.subr.mxu0 0.0
    %1228 = vmatpush2.msra.mxu0 0.0
    %1229 = vmatprep.subr.mxu0 0.0
    %1230 = vmatpush2.msra.mxu0 0.0
    %1231 = vmatprep.subr.mxu0 0.0
    %1232 = vmatpush2.msra.mxu0 0.0
    %1233 = vmatprep.subr.mxu0 0.0
    %1234 = vmatpush2.msra.mxu0 0.0
    %1235 = vmatprep.subr.mxu0 0.0
    %1236 = vmatpush2.msra.mxu0 0.0
    %1237 = vmatprep.subr.mxu0 0.0
    %1238 = vmatpush2.msra.mxu0 0.0
    %1239 = vmatprep.subr.mxu0 0.0
    %1240 = vmatpush2.msra.mxu0 0.0
    %1241 = vmatprep.mubr.f32.mxu0 0.0
    %1242 = vmatmul.mubr.f32.gmra.mxu0 %v1172
    %v1243 = vpop.f32.mrf.mxu0
    %v1244 = vadd.f32 0.0, %v1243
    %v1245 = vpop.f32.mrf.mxu0
    %1246 = vmatprep.mubr.f32.mxu0 0.0
    %1247 = vmatmul.mubr.f32.gmra.mxu0 %v1175
    %v1248 = vpop.f32.mrf.mxu0
    %v1249 = vadd.f32 0.0, %v1248
    %v1250 = vpop.f32.mrf.mxu0
    %1251 = vdwg.mxu0
    %v1253 = vsel %vm1170, %v854, 0
    %v1256 = vsel %vm1170, %v957, 0
    %1258 = vmatprep.subr.mxu0 0.0
    %1259 = vmatpush1.msra.mxu0 0.0
    %1260 = vmatprep.subr.mxu0 0.0
    %1261 = vmatpush1.msra.mxu0 0.0
    %1262 = vmatprep.subr.mxu0 0.0
    %1263 = vmatpush1.msra.mxu0 0.0
    %1264 = vmatprep.subr.mxu0 0.0
    %1265 = vmatpush1.msra.mxu0 0.0
    %1266 = vmatprep.subr.mxu0 0.0
    %1267 = vmatpush1.msra.mxu0 0.0
    %1268 = vmatprep.subr.mxu0 0.0
    %1269 = vmatpush1.msra.mxu0 0.0
    %1270 = vmatprep.subr.mxu0 0.0
    %1271 = vmatpush1.msra.mxu0 0.0
    %1272 = vmatprep.subr.mxu0 0.0
    %1273 = vmatpush1.msra.mxu0 0.0
    %1274 = vmatprep.subr.mxu0 0.0
    %1275 = vmatpush1.msra.mxu0 0.0
    %1276 = vmatprep.subr.mxu0 0.0
    %1277 = vmatpush1.msra.mxu0 0.0
    %1278 = vmatprep.subr.mxu0 0.0
    %1279 = vmatpush1.msra.mxu0 0.0
    %1280 = vmatprep.subr.mxu0 0.0
    %1281 = vmatpush1.msra.mxu0 0.0
    %1282 = vmatprep.subr.mxu0 0.0
    %1283 = vmatpush1.msra.mxu0 0.0
    %1284 = vmatprep.subr.mxu0 0.0
    %1285 = vmatpush1.msra.mxu0 0.0
    %1286 = vmatprep.subr.mxu0 0.0
    %1287 = vmatpush1.msra.mxu0 %v1167
    %1288 = vmatprep.subr.mxu0 0.0
    %1289 = vmatpush1.msra.mxu0 %v1166
    %1290 = vmatprep.subr.mxu0 0.0
    %1291 = vmatpush2.msra.mxu0 0.0
    %1292 = vmatprep.subr.mxu0 0.0
    %1293 = vmatpush2.msra.mxu0 0.0
    %1294 = vmatprep.subr.mxu0 0.0
    %1295 = vmatpush2.msra.mxu0 0.0
    %1296 = vmatprep.subr.mxu0 0.0
    %1297 = vmatpush2.msra.mxu0 0.0
    %1298 = vmatprep.subr.mxu0 0.0
    %1299 = vmatpush2.msra.mxu0 0.0
    %1300 = vmatprep.subr.mxu0 0.0
    %1301 = vmatpush2.msra.mxu0 0.0
    %1302 = vmatprep.subr.mxu0 0.0
    %1303 = vmatpush2.msra.mxu0 0.0
    %1304 = vmatprep.subr.mxu0 0.0
    %1305 = vmatpush2.msra.mxu0 0.0
    %1306 = vmatprep.subr.mxu0 0.0
    %1307 = vmatpush2.msra.mxu0 0.0
    %1308 = vmatprep.subr.mxu0 0.0
    %1309 = vmatpush2.msra.mxu0 0.0
    %1310 = vmatprep.subr.mxu0 0.0
    %1311 = vmatpush2.msra.mxu0 0.0
    %1312 = vmatprep.subr.mxu0 0.0
    %1313 = vmatpush2.msra.mxu0 0.0
    %1314 = vmatprep.subr.mxu0 0.0
    %1315 = vmatpush2.msra.mxu0 0.0
    %1316 = vmatprep.subr.mxu0 0.0
    %1317 = vmatpush2.msra.mxu0 0.0
    %1318 = vmatprep.subr.mxu0 0.0
    %1319 = vmatpush2.msra.mxu0 0.0
    %1320 = vmatprep.subr.mxu0 0.0
    %1321 = vmatpush2.msra.mxu0 0.0
    %1322 = vmatprep.mubr.f32.mxu0 0.0
    %1323 = vmatmul.mubr.f32.gmra.mxu0 %v1253
    %v1324 = vpop.f32.mrf.mxu0
    %v1325 = vadd.f32 %v1244, %v1324
    %v1326 = vpop.f32.mrf.mxu0
    %1327 = vmatprep.mubr.f32.mxu0 0.0
    %1328 = vmatmul.mubr.f32.gmra.mxu0 %v1256
    %v1329 = vpop.f32.mrf.mxu0
    %v1330 = vadd.f32 %v1249, %v1329
    %v1331 = vpop.f32.mrf.mxu0
    %1332 = vdwg.mxu0
    %v1333 = vld [vmem:[%s4] sm:$0x1]
    %v1335 = vlaneseq
    %v1336 = vshrl.u32 %v1335, 7
    %v1337 = vsub.s32 0, %v1336
    %v1338 = vrot.slane %v1333, %v1337
    %v1340 = vadd.f32 %v1325, %v1338
    %v1341 = vadd.f32 %v1330, %v1338
    %v1342 = vmax.f32 %v1340, 0.0
    %v1343 = vmax.f32 %v1341, 0.0
    %v1344 = vld [vmem:[%s5] sm:$0xff]
    %v1345 = vld [vmem:[%s5 + $0x8] sm:$0xff]
    %v1346 = vld [vmem:[%s5 + $0x10] sm:$0xff]
    %v1347 = vld [vmem:[%s5 + $0x18] sm:$0xff]
    %v1348 = vld [vmem:[%s5 + $0x20] sm:$0xff]
    %v1349 = vld [vmem:[%s5 + $0x28] sm:$0xff]
    %v1350 = vld [vmem:[%s5 + $0x30] sm:$0xff]
    %v1351 = vld [vmem:[%s5 + $0x38] sm:$0xff]
    %v1352 = vld [vmem:[%s6] sm:$0x1]
    %v1354 = vlaneseq
    %v1355 = vshrl.u32 %v1354, 7
    %v1356 = vsub.s32 0, %v1355
    %v1357 = vrot.slane %v1352, %v1356
    %vm1359 = vcmask 523264
    %v1361 = vsel %vm1359, %v1342, 0
    %v1364 = vsel %vm1359, %v1343, 0
    %1366 = vmatprep.subr.mxu0 0.0
    %1367 = vmatpush1.msra.mxu0 0.0
    %1368 = vmatprep.subr.mxu0 0.0
    %1369 = vmatpush1.msra.mxu0 0.0
    %1370 = vmatprep.subr.mxu0 0.0
    %1371 = vmatpush1.msra.mxu0 0.0
    %1372 = vmatprep.subr.mxu0 0.0
    %1373 = vmatpush1.msra.mxu0 0.0
    %1374 = vmatprep.subr.mxu0 0.0
    %1375 = vmatpush1.msra.mxu0 0.0
    %1376 = vmatprep.subr.mxu0 0.0
    %1377 = vmatpush1.msra.mxu0 0.0
    %1378 = vmatprep.subr.mxu0 0.0
    %1379 = vmatpush1.msra.mxu0 0.0
    %1380 = vmatprep.subr.mxu0 0.0
    %1381 = vmatpush1.msra.mxu0 0.0
    %1382 = vmatprep.subr.mxu0 0.0
    %1383 = vmatpush1.msra.mxu0 %v1351
    %1384 = vmatprep.subr.mxu0 0.0
    %1385 = vmatpush1.msra.mxu0 %v1350
    %1386 = vmatprep.subr.mxu0 0.0
    %1387 = vmatpush1.msra.mxu0 %v1349
    %1388 = vmatprep.subr.mxu0 0.0
    %1389 = vmatpush1.msra.mxu0 %v1348
    %1390 = vmatprep.subr.mxu0 0.0
    %1391 = vmatpush1.msra.mxu0 %v1347
    %1392 = vmatprep.subr.mxu0 0.0
    %1393 = vmatpush1.msra.mxu0 %v1346
    %1394 = vmatprep.subr.mxu0 0.0
    %1395 = vmatpush1.msra.mxu0 %v1345
    %1396 = vmatprep.subr.mxu0 0.0
    %1397 = vmatpush1.msra.mxu0 %v1344
    %1398 = vmatprep.subr.mxu0 0.0
    %1399 = vmatpush2.msra.mxu0 0.0
    %1400 = vmatprep.subr.mxu0 0.0
    %1401 = vmatpush2.msra.mxu0 0.0
    %1402 = vmatprep.subr.mxu0 0.0
    %1403 = vmatpush2.msra.mxu0 0.0
    %1404 = vmatprep.subr.mxu0 0.0
    %1405 = vmatpush2.msra.mxu0 0.0
    %1406 = vmatprep.subr.mxu0 0.0
    %1407 = vmatpush2.msra.mxu0 0.0
    %1408 = vmatprep.subr.mxu0 0.0
    %1409 = vmatpush2.msra.mxu0 0.0
    %1410 = vmatprep.subr.mxu0 0.0
    %1411 = vmatpush2.msra.mxu0 0.0
    %1412 = vmatprep.subr.mxu0 0.0
    %1413 = vmatpush2.msra.mxu0 0.0
    %1414 = vmatprep.subr.mxu0 0.0
    %1415 = vmatpush2.msra.mxu0 0.0
    %1416 = vmatprep.subr.mxu0 0.0
    %1417 = vmatpush2.msra.mxu0 0.0
    %1418 = vmatprep.subr.mxu0 0.0
    %1419 = vmatpush2.msra.mxu0 0.0
    %1420 = vmatprep.subr.mxu0 0.0
    %1421 = vmatpush2.msra.mxu0 0.0
    %1422 = vmatprep.subr.mxu0 0.0
    %1423 = vmatpush2.msra.mxu0 0.0
    %1424 = vmatprep.subr.mxu0 0.0
    %1425 = vmatpush2.msra.mxu0 0.0
    %1426 = vmatprep.subr.mxu0 0.0
    %1427 = vmatpush2.msra.mxu0 0.0
    %1428 = vmatprep.subr.mxu0 0.0
    %1429 = vmatpush2.msra.mxu0 0.0
    %1430 = vmatprep.mubr.f32.mxu0 0.0
    %1431 = vmatmul.mubr.f32.gmra.mxu0 %v1361
    %v1432 = vpop.f32.mrf.mxu0
    %v1433 = vadd.f32 %v1357, %v1432
    %v1434 = vpop.f32.mrf.mxu0
    %1435 = vmatprep.mubr.f32.mxu0 0.0
    %1436 = vmatmul.mubr.f32.gmra.mxu0 %v1364
    %v1437 = vpop.f32.mrf.mxu0
    %v1438 = vadd.f32 %v1357, %v1437
    %v1439 = vpop.f32.mrf.mxu0
    %1440 = vdwg.mxu0
    %1441 = vst [vmem:[#allocation2] sm:$0xff] %v1433
    %1442 = vst [vmem:[#allocation2 + $0x8] sm:$0xff] %v1438
    // Predicated region
    $region30: #{tpu_custom_call.1} parent=1 // pred_check
      _
    $region31: #{tpu_custom_call.1} parent=1 // pred_check_branch
      %1444 = sbr.rel (0) target = $region33
    $region32: #{tpu_custom_call.1} parent=1 // pred_region
      %s1446 = ssub.s32 256, 256
      %1447 = vsyncadd [#allocation3], %s1446
      %s1448 = sshll.u32 [#allocation2], 4
      %s1449 = int_to_ptr.vmem [resolvable:$true] %s1448
      %1454 = dma.vmem_to_hbm [thread:$0]  %s1449, 256, %s7, [#allocation3], 128, 128, 8
    $region33: #{tpu_custom_call.1} parent=1 // pred_fallthru
      _
    // Predicated region
    $region34: #{tpu_custom_call.1} parent=1 // pred_check
      _
    $region35: #{tpu_custom_call.1} parent=1 // pred_check_branch
      %1456 = sbr.rel (0) target = $region37
    $region36: #{tpu_custom_call.1} parent=1 // pred_region
      %1457 = dma.done [#allocation3], 256
    $region37: #{tpu_custom_call.1} parent=1 // pred_fallthru
      _
    %1458 = vsyncpa [#allocation3], 1

</llo_original>
